<compile_context>
chip_gen: v5e
topology: v5e:2x2
jax: 0.10.0
libtpu: 0.0.40
codegen_flags: <defaults>
</compile_context>

<pallas_src>
import functools

import jax
import jax.numpy as jnp
from jax.experimental import pallas as pl
from jax.experimental.pallas import tpu as pltpu

EPS = 1e-5


# ------------------------------------------------------------------ kernels --

def _conv_stats_kernel(xp_ref, w_ref, b_ref, y_ref, stats_ref, *, K, L):
    """conv (K taps, bf16 MXU, f32 acc) + bias for one batch element; also
    emits per-channel [sum; sum-of-squares] so BN stats can be folded later."""
    # first tap initializes the accumulator (no zero fill), remaining taps add
    acc = jnp.dot(xp_ref[0:L, :], w_ref[0], preferred_element_type=jnp.float32)
    for k in range(1, K):                                # static unrolled taps
        acc = acc + jnp.dot(xp_ref[k:k + L, :], w_ref[k],
                            preferred_element_type=jnp.float32)
    acc = acc + b_ref[...]                               # (1, Cout) broadcast
    y_ref[...] = acc
    # both stat rows in a single (2, Cout) store (no partial-row stores)
    stats_ref[...] = jnp.concatenate(
        [jnp.sum(acc, axis=0, keepdims=True),
         jnp.sum(acc * acc, axis=0, keepdims=True)], axis=0)


def _bn_relu_conv_stats_kernel(y1_ref, sc_ref, sh_ref, w_ref, b_ref,
                               y2_ref, stats_ref, hpad_scr, *, K, L, pad):
    """Folded BN1 (one mul + one add) + ReLU, then conv2 + bias + stats."""
    Cf = y1_ref.shape[1]
    h = jnp.maximum(y1_ref[...] * sc_ref[...] + sh_ref[...], 0.0)   # f32 VPU
    # Re-pad intermediate in VMEM scratch: zero ONLY the halo rows, write the
    # interior once (no full-buffer zero fill).  Scratch is bf16 for the MXU.
    # (Halos are re-zeroed every step so the kernel stays correct under
    # megacore grid sharding, where each core owns its own scratch.)
    if pad > 0:
        hpad_scr[:pad, :] = jnp.zeros((pad, Cf), hpad_scr.dtype)
        hpad_scr[pad + L:, :] = jnp.zeros((pad, Cf), hpad_scr.dtype)
    hpad_scr[pad:pad + L, :] = h.astype(hpad_scr.dtype)

    acc = jnp.dot(hpad_scr[0:L, :], w_ref[0], preferred_element_type=jnp.float32)
    for k in range(1, K):
        acc = acc + jnp.dot(hpad_scr[k:k + L, :], w_ref[k],
                            preferred_element_type=jnp.float32)
    acc = acc + b_ref[...]
    y2_ref[...] = acc
    stats_ref[...] = jnp.concatenate(
        [jnp.sum(acc, axis=0, keepdims=True),
         jnp.sum(acc * acc, axis=0, keepdims=True)], axis=0)


def _bn_relu_kernel(y2_ref, sc_ref, sh_ref, o_ref):
    o_ref[...] = jnp.maximum(y2_ref[...] * sc_ref[...] + sh_ref[...], 0.0)


def _bn_res_relu_kernel(y2_ref, res_ref, sc_ref, sh_ref, o_ref):
    # residual read from an aligned, unpadded ref (no offset slice / reshape)
    out = y2_ref[...] * sc_ref[...] + sh_ref[...] + res_ref[...]
    o_ref[...] = jnp.maximum(out, 0.0)


# ------------------------------------------------------------------ wrapper --

def _fold_bn(stats, count, gamma, beta):
    """stats: (B, 2, C) per-batch-element [sum; sumsq] -> (1,C) scale/shift."""
    s = jnp.sum(stats[:, 0, :], axis=0)
    sq = jnp.sum(stats[:, 1, :], axis=0)
    mean = s / count
    var = jnp.maximum(sq / count - mean * mean, 0.0)     # f32-accumulated
    scale = gamma * jax.lax.rsqrt(var + EPS)
    shift = beta - mean * scale
    return scale.reshape(1, -1), shift.reshape(1, -1)


def _compiler_params(est_vmem_bytes):
    # size the scoped VMEM limit to the actual per-step footprint (with slack),
    # clamped so it stays safe on v7x's 64 MiB physical VMEM.
    limit = int(min(max(4 * est_vmem_bytes, 8 * 2**20), 48 * 2**20))
    return pltpu.CompilerParams(dimension_semantics=("parallel",),
                                vmem_limit_bytes=limit)


def convolution_block(x, params, *, kernel_size=3, padding=1, shortcut=False):
    """x: (B, C_in, L) in PyTorch NCL layout. Returns (B, n_filters, L) f32."""
    w1, b1, g1, be1, w2, b2, g2, be2 = params
    B, Cin, L = x.shape
    Cf = w1.shape[0]
    K = kernel_size
    pad = padding
    Lp = L + 2 * pad
    if shortcut:
        assert Cin == Cf, "identity shortcut requires input_dim == n_filters"
    # TODO(synk): `downsampling` is an arbitrary external nn.Module; only the
    # identity shortcut is implemented here.

    # glue: NCL -> channels-last (lane-dense C); bf16 for the MXU operands
    x_cl = jnp.transpose(x, (0, 2, 1)).astype(jnp.float32)              # (B,L,Cin)
    xp = jnp.pad(x_cl, ((0, 0), (pad, pad), (0, 0))).astype(jnp.bfloat16)
    w1k = jnp.transpose(w1, (2, 1, 0)).astype(jnp.bfloat16)             # (K,Cin,Cf)
    w2k = jnp.transpose(w2, (2, 1, 0)).astype(jnp.bfloat16)             # (K,Cf,Cf)
    b1r = b1.reshape(1, -1).astype(jnp.float32)
    b2r = b2.reshape(1, -1).astype(jnp.float32)

    def fullspec(shape):
        # constant index map across the grid -> tile stays VMEM-resident
        return pl.BlockSpec(shape, lambda b, _s=shape: (0,) * len(_s))

    def per_b(shape):
        return pl.BlockSpec((None,) + shape, lambda b: (b, 0, 0))

    # ---------------- phase 1: conv1 + per-batch stats ----------------------
    flops1 = 2 * B * L * K * Cin * Cf
    bytes1 = xp.size * 2 + w1k.size * 2 + B * L * Cf * 4 + B * 2 * Cf * 4
    vmem1 = 2 * (Lp * Cin * 2 + L * Cf * 4) + K * Cin * Cf * 2 + 2 * Cf * 4
    y1, st1 = pl.pallas_call(
        functools.partial(_conv_stats_kernel, K=K, L=L),
        grid=(B,),
        in_specs=[per_b((Lp, Cin)), fullspec((K, Cin, Cf)), fullspec((1, Cf))],
        out_specs=[per_b((L, Cf)), per_b((2, Cf))],
        out_shape=[jax.ShapeDtypeStruct((B, L, Cf), jnp.float32),
                   jax.ShapeDtypeStruct((B, 2, Cf), jnp.float32)],
        compiler_params=_compiler_params(vmem1),
        cost_estimate=pl.CostEstimate(flops=flops1, transcendentals=0,
                                      bytes_accessed=bytes1),
    )(xp, w1k, b1r)

    n = float(B * L)
    sc1, sh1 = _fold_bn(st1, n, g1.astype(jnp.float32), be1.astype(jnp.float32))

    # ---------------- phase 2: bn1 + relu + conv2 + stats --------------------
    flops2 = 2 * B * L * K * Cf * Cf
    bytes2 = 2 * B * L * Cf * 4 + w2k.size * 2 + B * 2 * Cf * 4
    vmem2 = 4 * (L * Cf * 4) + K * Cf * Cf * 2 + Lp * Cf * 2 + 6 * Cf * 4
    y2, st2 = pl.pallas_call(
        functools.partial(_bn_relu_conv_stats_kernel, K=K, L=L, pad=pad),
        grid=(B,),
        in_specs=[per_b((L, Cf)), fullspec((1, Cf)), fullspec((1, Cf)),
                  fullspec((K, Cf, Cf)), fullspec((1, Cf))],
        out_specs=[per_b((L, Cf)), per_b((2, Cf))],
        out_shape=[jax.ShapeDtypeStruct((B, L, Cf), jnp.float32),
                   jax.ShapeDtypeStruct((B, 2, Cf), jnp.float32)],
        scratch_shapes=[pltpu.VMEM((Lp, Cf), jnp.bfloat16)],
        compiler_params=_compiler_params(vmem2),
        cost_estimate=pl.CostEstimate(flops=flops2, transcendentals=0,
                                      bytes_accessed=bytes2),
    )(y1, sc1, sh1, w2k, b2r)

    sc2, sh2 = _fold_bn(st2, n, g2.astype(jnp.float32), be2.astype(jnp.float32))

    # ---------------- phase 3: bn2 (+ residual) + relu -----------------------
    nstream = 3 if shortcut else 2
    vmem3 = 2 * nstream * (L * Cf * 4) + 4 * Cf * 4
    if shortcut:
        out_cl = pl.pallas_call(
            _bn_res_relu_kernel,
            grid=(B,),
            in_specs=[per_b((L, Cf)), per_b((L, Cin)),
                      fullspec((1, Cf)), fullspec((1, Cf))],
            out_specs=per_b((L, Cf)),
            out_shape=jax.ShapeDtypeStruct((B, L, Cf), jnp.float32),
            compiler_params=_compiler_params(vmem3),
        )(y2, x_cl, sc2, sh2)
    else:
        out_cl = pl.pallas_call(
            _bn_relu_kernel,
            grid=(B,),
            in_specs=[per_b((L, Cf)), fullspec((1, Cf)), fullspec((1, Cf))],
            out_specs=per_b((L, Cf)),
            out_shape=jax.ShapeDtypeStruct((B, L, Cf), jnp.float32),
            compiler_params=_compiler_params(vmem3),
        )(y2, sc2, sh2)

    # back to PyTorch NCL
    return jnp.transpose(out_cl, (0, 2, 1))


# ---------------------------------------------------------- test utilities --

def init_params(key, input_dim, n_filters, kernel_size):
    """Deterministic synthetic init (kaiming-normal-style conv weights,
    PyTorch-default BN affine params)."""
    k1, k2, k3, k4 = jax.random.split(key, 4)
    fan1 = input_dim * kernel_size
    fan2 = n_filters * kernel_size
    w1 = jax.random.normal(k1, (n_filters, input_dim, kernel_size),
                           jnp.float32) * jnp.sqrt(2.0 / fan1)
    b1 = jax.random.uniform(k2, (n_filters,), jnp.float32,
                            -1.0 / jnp.sqrt(fan1), 1.0 / jnp.sqrt(fan1))
    w2 = jax.random.normal(k3, (n_filters, n_filters, kernel_size),
                           jnp.float32) * jnp.sqrt(2.0 / fan2)
    b2 = jax.random.uniform(k4, (n_filters,), jnp.float32,
                            -1.0 / jnp.sqrt(fan2), 1.0 / jnp.sqrt(fan2))
    g1 = jnp.ones((n_filters,), jnp.float32)
    be1 = jnp.zeros((n_filters,), jnp.float32)
    g2 = jnp.ones((n_filters,), jnp.float32)
    be2 = jnp.zeros((n_filters,), jnp.float32)
    return (w1, b1, g1, be1, w2, b2, g2, be2)


def reference_forward(x, params, *, padding=1, shortcut=False):
    """Pure-JAX f32 reference mirroring the PyTorch forward (training-mode BN)."""
    w1, b1, g1, be1, w2, b2, g2, be2 = params

    def conv1d(x, w, b):
        y = jax.lax.conv_general_dilated(
            x, w, window_strides=(1,), padding=((padding, padding),),
            dimension_numbers=('NCH', 'OIH', 'NCH'))
        return y + b[None, :, None]

    def bn(y, g, be):
        m = jnp.mean(y, axis=(0, 2), keepdims=True)
        v = jnp.mean((y - m) ** 2, axis=(0, 2), keepdims=True)
        return (y - m) * jax.lax.rsqrt(v + EPS) * g[None, :, None] + be[None, :, None]

    h = jnp.maximum(bn(conv1d(x, w1, b1), g1, be1), 0.0)
    out = bn(conv1d(h, w2, b2), g2, be2)
    if shortcut:
        out = out + x
    return jnp.maximum(out, 0.0)


if __name__ == "__main__":
    key = jax.random.PRNGKey(0)
    B, Cin, L = 2, 16, 16          # small test shapes (module default 128 -> 256)
    Cf, K, pad = 16, 3, 1
    kx, kp = jax.random.split(key)
    x = jax.random.normal(kx, (B, Cin, L), jnp.float32)
    params = init_params(kp, Cin, Cf, K)

    for sc in (False, True):       # Cin == Cf so the identity shortcut is valid
        out = convolution_block(x, params, kernel_size=K, padding=pad, shortcut=sc)
        out = jax.block_until_ready(out)
        ref = reference_forward(x, params, padding=pad, shortcut=sc)
        assert out.shape == (B, Cf, L), out.shape
        # bf16 MXU operands -> looser tolerance vs the f32 reference
        max_err = float(jnp.max(jnp.abs(out - ref)))
        assert jnp.allclose(out, ref, atol=1e-1, rtol=1e-1), max_err
    print("KERNEL_OK")
</pallas_src>

<mosaic_0001>
module attributes {stable_mosaic.version = 11 : i64} {
  func.func @_conv_stats_kernel(%arg0: i32, %arg1: memref<1x18x16xbf16, #tpu.memory_space<vmem>>, %arg2: memref<3x16x16xbf16, #tpu.memory_space<vmem>>, %arg3: memref<1x16xf32, #tpu.memory_space<vmem>>, %arg4: memref<1x16x16xf32, #tpu.memory_space<vmem>>, %arg5: memref<1x2x16xf32, #tpu.memory_space<vmem>>) attributes {dimension_semantics = [#tpu.dimension_semantics<parallel>], iteration_bounds = array<i64: 2>, scalar_prefetch = 0 : i64, scratch_operands = 0 : i64, tpu.core_type = #tpu.core_type<tc>, window_params = [{transform_indices = @transform_0, window_bounds = array<i64: 1, 18, 16>}, {pipeline_mode = #tpu.pipeline_mode<synchronous>, transform_indices = @transform_1, window_bounds = array<i64: 3, 16, 16>}, {pipeline_mode = #tpu.pipeline_mode<synchronous>, transform_indices = @transform_2, window_bounds = array<i64: 1, 16>}, {transform_indices = @transform_3, window_bounds = array<i64: 1, 16, 16>}, {transform_indices = @transform_4, window_bounds = array<i64: 1, 2, 16>}]} {
    %c0 = arith.constant 0 : index
    %c0_0 = arith.constant 0 : index
    %c0_1 = arith.constant 0 : index
    %0 = vector.load %arg1[%c0, %c0_0, %c0_1] : memref<1x18x16xbf16, #tpu.memory_space<vmem>>, vector<1x16x16xbf16>
    %1 = vector.shape_cast %0 : vector<1x16x16xbf16> to vector<16x16xbf16>
    %c0_2 = arith.constant 0 : index
    %c0_3 = arith.constant 0 : index
    %c0_4 = arith.constant 0 : index
    %2 = vector.load %arg2[%c0_2, %c0_3, %c0_4] : memref<3x16x16xbf16, #tpu.memory_space<vmem>>, vector<1x16x16xbf16>
    %3 = vector.shape_cast %2 : vector<1x16x16xbf16> to vector<16x16xbf16>
    %cst = arith.constant dense<0.000000e+00> : vector<16x16xf32>
    %4 = tpu.matmul %1, %3, %cst {dimension_numbers = #tpu.dot_dimension_numbers<[1], [0], [0], [1], [0, 0, 1, 1], [], []>} : vector<16x16xbf16>, vector<16x16xbf16>, vector<16x16xf32> -> vector<16x16xf32>
    %c0_5 = arith.constant 0 : index
    %c1 = arith.constant 1 : index
    %c0_6 = arith.constant 0 : index
    %5 = vector.load %arg1[%c0_5, %c1, %c0_6] : memref<1x18x16xbf16, #tpu.memory_space<vmem>>, vector<1x16x16xbf16>
    %6 = vector.shape_cast %5 : vector<1x16x16xbf16> to vector<16x16xbf16>
    %c1_7 = arith.constant 1 : index
    %c0_8 = arith.constant 0 : index
    %c0_9 = arith.constant 0 : index
    %7 = vector.load %arg2[%c1_7, %c0_8, %c0_9] : memref<3x16x16xbf16, #tpu.memory_space<vmem>>, vector<1x16x16xbf16>
    %8 = vector.shape_cast %7 : vector<1x16x16xbf16> to vector<16x16xbf16>
    %cst_10 = arith.constant dense<0.000000e+00> : vector<16x16xf32>
    %9 = tpu.matmul %6, %8, %cst_10 {dimension_numbers = #tpu.dot_dimension_numbers<[1], [0], [0], [1], [0, 0, 1, 1], [], []>} : vector<16x16xbf16>, vector<16x16xbf16>, vector<16x16xf32> -> vector<16x16xf32>
    %10 = arith.addf %4, %9 : vector<16x16xf32>
    %c0_11 = arith.constant 0 : index
    %c2 = arith.constant 2 : index
    %c0_12 = arith.constant 0 : index
    %11 = vector.load %arg1[%c0_11, %c2, %c0_12] : memref<1x18x16xbf16, #tpu.memory_space<vmem>>, vector<1x16x16xbf16>
    %12 = vector.shape_cast %11 : vector<1x16x16xbf16> to vector<16x16xbf16>
    %c2_13 = arith.constant 2 : index
    %c0_14 = arith.constant 0 : index
    %c0_15 = arith.constant 0 : index
    %13 = vector.load %arg2[%c2_13, %c0_14, %c0_15] : memref<3x16x16xbf16, #tpu.memory_space<vmem>>, vector<1x16x16xbf16>
    %14 = vector.shape_cast %13 : vector<1x16x16xbf16> to vector<16x16xbf16>
    %cst_16 = arith.constant dense<0.000000e+00> : vector<16x16xf32>
    %15 = tpu.matmul %12, %14, %cst_16 {dimension_numbers = #tpu.dot_dimension_numbers<[1], [0], [0], [1], [0, 0, 1, 1], [], []>} : vector<16x16xbf16>, vector<16x16xbf16>, vector<16x16xf32> -> vector<16x16xf32>
    %16 = arith.addf %10, %15 : vector<16x16xf32>
    %c0_17 = arith.constant 0 : index
    %c0_18 = arith.constant 0 : index
    %17 = vector.load %arg3[%c0_17, %c0_18] : memref<1x16xf32, #tpu.memory_space<vmem>>, vector<1x16xf32>
    %18 = vector.broadcast %17 : vector<1x16xf32> to vector<16x16xf32>
    %19 = arith.addf %16, %18 : vector<16x16xf32>
    %c0_19 = arith.constant 0 : index
    %c0_20 = arith.constant 0 : index
    %c0_21 = arith.constant 0 : index
    %20 = vector.load %arg4[%c0_19, %c0_20, %c0_21] : memref<1x16x16xf32, #tpu.memory_space<vmem>>, vector<1x16x16xf32>
    %21 = vector.shape_cast %20 : vector<1x16x16xf32> to vector<16x16xf32>
    %22 = vector.shape_cast %19 : vector<16x16xf32> to vector<1x16x16xf32>
    tpu.vector_store %arg4[%c0_19, %c0_20, %c0_21], %22 {strides = array<i32>} : memref<1x16x16xf32, #tpu.memory_space<vmem>>, vector<1x16x16xf32>,
    %cst_22 = arith.constant dense<0.000000e+00> : vector<16xf32>
    %23 = vector.multi_reduction <add>, %19, %cst_22 [0] : vector<16x16xf32> to vector<16xf32>
    %24 = vector.shape_cast %23 : vector<16xf32> to vector<1x16xf32>
    %25 = arith.mulf %19, %19 : vector<16x16xf32>
    %cst_23 = arith.constant dense<0.000000e+00> : vector<16xf32>
    %26 = vector.multi_reduction <add>, %25, %cst_23 [0] : vector<16x16xf32> to vector<16xf32>
    %27 = vector.shape_cast %26 : vector<16xf32> to vector<1x16xf32>
    %28 = tpu.concatenate %24, %27 in 0 : vector<1x16xf32>, vector<1x16xf32> -> vector<2x16xf32>
    %c0_24 = arith.constant 0 : index
    %c0_25 = arith.constant 0 : index
    %c0_26 = arith.constant 0 : index
    %29 = vector.load %arg5[%c0_24, %c0_25, %c0_26] : memref<1x2x16xf32, #tpu.memory_space<vmem>>, vector<1x2x16xf32>
    %30 = vector.shape_cast %29 : vector<1x2x16xf32> to vector<2x16xf32>
    %31 = vector.shape_cast %28 : vector<2x16xf32> to vector<1x2x16xf32>
    tpu.vector_store %arg5[%c0_24, %c0_25, %c0_26], %31 {strides = array<i32>} : memref<1x2x16xf32, #tpu.memory_space<vmem>>, vector<1x2x16xf32>,
    return
  }
  func.func @transform_0(%arg0: i32) -> (i32, i32, i32) {
    %c0_i32 = arith.constant 0 : i32
    %c0_i32_0 = arith.constant 0 : i32
    %c0_i32_1 = arith.constant 0 : i32
    return %arg0, %c0_i32, %c0_i32_0 : i32, i32, i32
  }
  func.func @transform_1(%arg0: i32) -> (i32, i32, i32) {
    %c0_i32 = arith.constant 0 : i32
    %c0_i32_0 = arith.constant 0 : i32
    %c0_i32_1 = arith.constant 0 : i32
    %c0_i32_2 = arith.constant 0 : i32
    return %c0_i32, %c0_i32_0, %c0_i32_1 : i32, i32, i32
  }
  func.func @transform_2(%arg0: i32) -> (i32, i32) {
    %c0_i32 = arith.constant 0 : i32
    %c0_i32_0 = arith.constant 0 : i32
    %c0_i32_1 = arith.constant 0 : i32
    return %c0_i32, %c0_i32_0 : i32, i32
  }
  func.func @transform_3(%arg0: i32) -> (i32, i32, i32) {
    %c0_i32 = arith.constant 0 : i32
    %c0_i32_0 = arith.constant 0 : i32
    %c0_i32_1 = arith.constant 0 : i32
    return %arg0, %c0_i32, %c0_i32_0 : i32, i32, i32
  }
  func.func @transform_4(%arg0: i32) -> (i32, i32, i32) {
    %c0_i32 = arith.constant 0 : i32
    %c0_i32_0 = arith.constant 0 : i32
    %c0_i32_1 = arith.constant 0 : i32
    return %arg0, %c0_i32, %c0_i32_0 : i32, i32, i32
  }
}

</mosaic_0001>

<llo_original>
// kernel: tpu_custom_call.1
$region0: #{tpu_custom_call.1}
  #allocation0 [shape = 'u32[]', space=smem, size = 0x4, offset = 0x4, fixed_abs, tag = 'smem constant byte address 0x4 - core index']
  #allocation1 [shape = 'u32[72,128]{1,0:T(1,128)}', space=vmem, size = 0x9000, scoped, tag = 'internal scratch']
  %s0 = inlined_call_operand.vmem [shape: bf16[2,18,16], index: 0, kind: input, shape index: {}]
  %s1 = inlined_call_operand.vmem [shape: bf16[3,16,16], index: 1, kind: input, shape index: {}]
  %s2 = inlined_call_operand.vmem [shape: f32[1,16], index: 2, kind: input, shape index: {}]
  %s3 = inlined_call_operand.hbm [shape: f32[2,16,16], index: 3, kind: output, shape index: {0}]
  %s4 = inlined_call_operand.hbm [shape: f32[2,2,16], index: 4, kind: output, shape index: {1}]
  %5 = xla_tuple %s3, %s4
  %s6 = sld [smem:[#allocation0]]
  $region53: #{tpu_custom_call.1} parent=0
    _
  %s8 = ssub.s32 1, %s6
  %s9 = scalar_select 0, %s8, %s6
  $region1: #{tpu_custom_call.1} parent=0
    #allocation2 [shape = 'u8[16384]{0}', space=vmem, size = 0x4000, scoped, tag = 'output window, operand 0']
    #allocation3 [shape = 's32[2]{0}', space=sflag, size = 0x8, scoped, tag = 'scoped memory for tpu_custom_call.1']
    #allocation4 [shape = 'u8[2048]{0}', space=vmem, size = 0x800, scoped, tag = 'output window, operand 1']
    #allocation5 [shape = 's32[2]{0}', space=sflag, size = 0x8, scoped, tag = 'scoped memory for tpu_custom_call.1']
    %10 = vsyncpa [#allocation3], 0
    %s11 = scalar_lea.sflag [#allocation3], 1
    %12 = vsyncpa %s11, 0
    %13 = vsyncpa [#allocation5], 0
    %s14 = scalar_lea.sflag [#allocation5], 1
    %15 = vsyncpa %s14, 0
    loop: start=0, step=1, limit=4
    $region2: #{tpu_custom_call.1} parent=1 // loop_pre_header
      _
    $region3: #{tpu_custom_call.1} parent=1 // loop_header
      %s17 = sphi 0, %s21
      %p18 = scmp.ge.s32.totalorder %s17, 4
      %s27 = sphi 0, %s29
      %s30 = sphi 0, %s27
      %s31 = sphi 0, %s30
      %s47 = sphi 0, %s31
      %s51 = sphi 0, %s51
      %s53 = sphi 0, %s51
      %s54 = sphi 0, %s53
      %s68 = sphi 0, %s54
      %s72 = sphi 0, %s72
      %s74 = sphi 0, %s72
      %s75 = sphi 0, %s74
      %s89 = sphi 0, %s75
      %s95 = sphi 0, %s97
      %s98 = sphi 0, %s95
      %s99 = sphi 0, %s98
      %s115 = sphi 0, %s99
      %s121 = sphi 0, %s123
      %s124 = sphi 0, %s121
      %s125 = sphi 0, %s124
      %s141 = sphi 0, %s125
    $region4: #{tpu_custom_call.1} parent=1 // loop_header_branch
      %20 = sbr.rel (%p18) target = $region8
    $region5: #{tpu_custom_call.1} parent=1 // loop_body
      %s22 = ssub.s32 %s17, 1
      %s23 = ssub.s32 %s17, 2
      %s24 = sadd.s32 %s17, 1
      %s25 = ssub.s32 %s17, %s24
      %p26 = scmp.eq.s32.totalorder %s25, 0
      %s28 = sadd.s32 %s27, 1
      %s29 = scalar_select %p26, %s27, %s28
      %p32 = pneg %p26
      %p33 = scmp.eq.s32.totalorder %s17, 1
      %p34 = por %p32, %p33
      %p35 = scmp.ne.s32.totalorder %s27, %s30
      %p36 = scmp.eq.s32.totalorder %s17, 0
      %p37 = por %p35, %p36
      %p38 = scmp.ne.s32.totalorder %s27, %s30
      %p39 = scmp.eq.s32.totalorder %s22, 1
      %p40 = por %p38, %p39
      %p41 = scmp.ne.s32.totalorder %s30, %s31
      %p42 = scmp.eq.s32.totalorder %s22, 0
      %p43 = por %p41, %p42
      %p44 = scmp.ne.s32.totalorder %s30, %s31
      %p45 = scmp.eq.s32.totalorder %s23, 1
      %p46 = por %p44, %p45
      %p48 = scmp.ne.s32.totalorder %s31, %s47
      %p49 = scmp.eq.s32.totalorder %s23, 0
      %p50 = por %p48, %p49
      %s52 = sadd.s32 %s51, 1
      %p55 = scmp.eq.s32.totalorder %s17, 1
      %p56 = scmp.ne.s32.totalorder %s51, %s53
      %p57 = scmp.eq.s32.totalorder %s17, 0
      %p58 = por %p56, %p57
      %p59 = scmp.ne.s32.totalorder %s51, %s53
      %p60 = scmp.eq.s32.totalorder %s22, 1
      %p61 = por %p59, %p60
      %p62 = scmp.ne.s32.totalorder %s53, %s54
      %p63 = scmp.eq.s32.totalorder %s22, 0
      %p64 = por %p62, %p63
      %p65 = scmp.ne.s32.totalorder %s53, %s54
      %p66 = scmp.eq.s32.totalorder %s23, 1
      %p67 = por %p65, %p66
      %p69 = scmp.ne.s32.totalorder %s54, %s68
      %p70 = scmp.eq.s32.totalorder %s23, 0
      %p71 = por %p69, %p70
      %s73 = sadd.s32 %s72, 1
      %p76 = scmp.eq.s32.totalorder %s17, 1
      %p77 = scmp.ne.s32.totalorder %s72, %s74
      %p78 = scmp.eq.s32.totalorder %s17, 0
      %p79 = por %p77, %p78
      %p80 = scmp.ne.s32.totalorder %s72, %s74
      %p81 = scmp.eq.s32.totalorder %s22, 1
      %p82 = por %p80, %p81
      %p83 = scmp.ne.s32.totalorder %s74, %s75
      %p84 = scmp.eq.s32.totalorder %s22, 0
      %p85 = por %p83, %p84
      %p86 = scmp.ne.s32.totalorder %s74, %s75
      %p87 = scmp.eq.s32.totalorder %s23, 1
      %p88 = por %p86, %p87
      %p90 = scmp.ne.s32.totalorder %s75, %s89
      %p91 = scmp.eq.s32.totalorder %s23, 0
      %p92 = por %p90, %p91
      %s93 = ssub.s32 %s17, %s24
      %p94 = scmp.eq.s32.totalorder %s93, 0
      %s96 = sadd.s32 %s95, 1
      %s97 = scalar_select %p94, %s95, %s96
      %p100 = pneg %p94
      %p101 = scmp.eq.s32.totalorder %s17, 1
      %p102 = por %p100, %p101
      %p103 = scmp.ne.s32.totalorder %s95, %s98
      %p104 = scmp.eq.s32.totalorder %s17, 0
      %p105 = por %p103, %p104
      %p106 = scmp.ne.s32.totalorder %s95, %s98
      %p107 = scmp.eq.s32.totalorder %s22, 1
      %p108 = por %p106, %p107
      %p109 = scmp.ne.s32.totalorder %s98, %s99
      %p110 = scmp.eq.s32.totalorder %s22, 0
      %p111 = por %p109, %p110
      %p112 = scmp.ne.s32.totalorder %s98, %s99
      %p113 = scmp.eq.s32.totalorder %s23, 1
      %p114 = por %p112, %p113
      %p116 = scmp.ne.s32.totalorder %s99, %s115
      %p117 = scmp.eq.s32.totalorder %s23, 0
      %p118 = por %p116, %p117
      %s119 = ssub.s32 %s17, %s24
      %p120 = scmp.eq.s32.totalorder %s119, 0
      %s122 = sadd.s32 %s121, 1
      %s123 = scalar_select %p120, %s121, %s122
      %p126 = pneg %p120
      %p127 = scmp.eq.s32.totalorder %s17, 1
      %p128 = por %p126, %p127
      %p129 = scmp.ne.s32.totalorder %s121, %s124
      %p130 = scmp.eq.s32.totalorder %s17, 0
      %p131 = por %p129, %p130
      %p132 = scmp.ne.s32.totalorder %s121, %s124
      %p133 = scmp.eq.s32.totalorder %s22, 1
      %p134 = por %p132, %p133
      %p135 = scmp.ne.s32.totalorder %s124, %s125
      %p136 = scmp.eq.s32.totalorder %s22, 0
      %p137 = por %p135, %p136
      %p138 = scmp.ne.s32.totalorder %s124, %s125
      %p139 = scmp.eq.s32.totalorder %s23, 1
      %p140 = por %p138, %p139
      %p142 = scmp.ne.s32.totalorder %s125, %s141
      %p143 = scmp.eq.s32.totalorder %s23, 0
      %p144 = por %p142, %p143
      %p145 = scmp.le.s32.totalorder 1, %s17
      %p146 = scmp.lt.s32.totalorder %s17, 3
      %p147 = pnand %p145, %p146
      %p148 = pneg %p147
      // Predicated region
      $region9: #{tpu_custom_call.1} parent=5 // pred_check
        _
      $region10: #{tpu_custom_call.1} parent=5 // pred_check_branch
        %150 = sbr.rel (%p147) target = $region12
      $region11: #{tpu_custom_call.1} parent=5 // pred_region
        %s151 = ssub.s32 %s17, 1
        // Predicated region
        $region13: #{tpu_custom_call.1} parent=11 // pred_check
          %p152 = pneg %p64
        $region14: #{tpu_custom_call.1} parent=11 // pred_check_branch
          %154 = sbr.rel (%p152) target = $region16
        $region15: #{tpu_custom_call.1} parent=11 // pred_region
          _
        $region16: #{tpu_custom_call.1} parent=11 // pred_fallthru
          _
        // Predicated region
        $region17: #{tpu_custom_call.1} parent=11 // pred_check
          %p155 = pneg %p85
        $region18: #{tpu_custom_call.1} parent=11 // pred_check_branch
          %157 = sbr.rel (%p155) target = $region20
        $region19: #{tpu_custom_call.1} parent=11 // pred_region
          _
        $region20: #{tpu_custom_call.1} parent=11 // pred_fallthru
          _
      $region12: #{tpu_custom_call.1} parent=5 // pred_fallthru
        _
      %p158 = scmp.lt.s32.totalorder %s17, 2
      // Predicated region
      $region21: #{tpu_custom_call.1} parent=5 // pred_check
        %p159 = pneg %p158
      $region22: #{tpu_custom_call.1} parent=5 // pred_check_branch
        %161 = sbr.rel (%p159) target = $region24
      $region23: #{tpu_custom_call.1} parent=5 // pred_region
        // Predicated region
        $region25: #{tpu_custom_call.1} parent=23 // pred_check
          %p162 = pneg %p37
        $region26: #{tpu_custom_call.1} parent=23 // pred_check_branch
          %164 = sbr.rel (%p162) target = $region28
        $region27: #{tpu_custom_call.1} parent=23 // pred_region
          %p165 = scmp.lt.s32.totalorder %s17, 1
          %s166 = scalar_select %p165, %s17, 1
          %s167 = smul.addr %s166, 3
          %s168 = smul.addr %s167, 4
          %s169 = scalar_lea.vmem %s0, %s168
        $region28: #{tpu_custom_call.1} parent=23 // pred_fallthru
          _
      $region24: #{tpu_custom_call.1} parent=5 // pred_fallthru
        _
      %p170 = scmp.le.s32.totalorder 1, %s17
      %p171 = scmp.lt.s32.totalorder %s17, 3
      %p172 = pnand %p170, %p171
      %p173 = pneg %p172
      // Predicated region
      $region29: #{tpu_custom_call.1} parent=5 // pred_check
        _
      $region30: #{tpu_custom_call.1} parent=5 // pred_check_branch
        %175 = sbr.rel (%p172) target = $region32
      $region31: #{tpu_custom_call.1} parent=5 // pred_region
        %s176 = ssub.s32 %s17, 1
        %p177 = scmp.lt.s32.totalorder %s22, 1
        %s178 = scalar_select %p177, %s22, 1
        %s179 = smul.addr %s178, 3
        %s180 = smul.addr %s179, 4
        %s181 = scalar_lea.vmem %s0, %s180
        %p182 = pneg %p43
        %p183 = pneg %p40
        %p184 = pneg %p64
        %p185 = pneg %p61
        %p186 = pneg %p85
        %p187 = pneg %p82
        %p188 = pneg %p111
        %p189 = pneg %p108
        %s190 = sand.u32 %s98, 1
        %s191 = scalar_lea.sflag [#allocation3], %s190
        %s192 = sand.u32 %s98, 1
        %s193 = smul.addr %s192, 16
        %s194 = scalar_lea.vmem [#allocation2], %s193
        %p195 = pneg %p137
        %p196 = pneg %p134
        %s197 = sand.u32 %s124, 1
        %s198 = scalar_lea.sflag [#allocation5], %s197
        %s199 = sand.u32 %s124, 1
        %s200 = smul.addr %s199, 2
        %s201 = scalar_lea.vmem [#allocation4], %s200
        %p202 = scmp.lt.s32.totalorder %s22, 1
        %s203 = scalar_select %p202, %s22, 1
        %s204 = smul.addr %s203, 3
        %s205 = smul.addr %s204, 4
        %s206 = scalar_lea.vmem %s0, %s205
        %v208 = vld [vmem:[%s206] sm:$0xf]
        %v209 = vld [vmem:[%s206 + $0x4] sm:$0xf]
        %v210 = vld [vmem:[%s1] sm:$0xf]
        %v211 = vld [vmem:[%s1 + $0x4] sm:$0xf]
        %v212 = vld [vmem:[%s206 + $0x8] sm:$0x1]
        %s213 = scalar_lea.vmem %s1, 8
        %v214 = vld [vmem:[%s213] sm:$0xf]
        %v215 = vld [vmem:[%s213 + $0x4] sm:$0xf]
        %v219 = vunpack.c.l.b16 %v208
        %v220 = vunpack.c.l.b16 %v209
        %v221 = vunpack.c.l.b16 %v212
        %v222 = vpack.c.b16 %v220, %v219
        %v223 = vpack.c.b16 %v221, %v221
        %vm224 = vsmask.f32 7424
        %v226 = vshrl.u32 %v222, 16
        %v228 = vshll.u32 %v222, 16
        %v230 = vrot.slane %v228, 1
        %v231 = vor.u32 %v226, %v230
        %v233 = vshll.u32 %v223, 16
        %v235 = vrot.slane %v233, 1
        %v236 = vsel %vm224, %v231, %v235
        %v239 = vunpack.c.l.b16 %v214
        %v240 = vunpack.c.l.b16 %v215
        %v241 = vpack.c.b16 %v240, %v239
        %vm243 = vcmask 130048
        %v245 = vsel %vm243, %v236, 0
        %247 = vmatpush.bf16.msra.mxu0 0
        %248 = vmatpush.bf16.msra.mxu0 0
        %249 = vmatpush.bf16.msra.mxu0 0
        %250 = vmatpush.bf16.msra.mxu0 0
        %251 = vmatpush.bf16.msra.mxu0 0
        %252 = vmatpush.bf16.msra.mxu0 0
        %253 = vmatpush.bf16.msra.mxu0 0
        %254 = vmatpush.bf16.msra.mxu0 %v241
        %255 = vmatmul.bf16.gmra.mxu0 %v245
        %v256 = vpop.f32.mrf.mxu0
        %v257 = vadd.f32 0.0, %v256
        %v258 = vpop.f32.mrf.mxu0
        %v259 = vadd.f32 0.0, %v258
        %260 = vdwg.mxu0
        %v263 = vunpack.c.l.b16 %v210
        %v264 = vunpack.c.l.b16 %v211
        %v265 = vpack.c.b16 %v264, %v263
        %v267 = vsel %vm243, %v222, 0
        %269 = vmatpush.bf16.msra.mxu0 0
        %270 = vmatpush.bf16.msra.mxu0 0
        %271 = vmatpush.bf16.msra.mxu0 0
        %272 = vmatpush.bf16.msra.mxu0 0
        %273 = vmatpush.bf16.msra.mxu0 0
        %274 = vmatpush.bf16.msra.mxu0 0
        %275 = vmatpush.bf16.msra.mxu0 0
        %276 = vmatpush.bf16.msra.mxu0 %v265
        %277 = vmatmul.bf16.gmra.mxu0 %v267
        %v278 = vpop.f32.mrf.mxu0
        %v279 = vadd.f32 %v257, %v278
        %v280 = vpop.f32.mrf.mxu0
        %v281 = vadd.f32 %v259, %v280
        %282 = vdwg.mxu0
        %v283 = vld [vmem:[%s206] sm:$0xe]
        %s284 = scalar_lea.vmem %s1, 16
        %v285 = vld [vmem:[%s284] sm:$0xf]
        %v286 = vld [vmem:[%s284 + $0x4] sm:$0xf]
        %v288 = vunpack.c.l.b16 %v283
        %v289 = vpack.c.b16 %v220, %v288
        %vm290 = vcmask 1046528
        %v291 = vrot.slane %v289, 1
        %v292 = vrot.slane %v223, 1
        %v293 = vsel %vm290, %v291, %v292
        %v296 = vunpack.c.l.b16 %v285
        %v297 = vunpack.c.l.b16 %v286
        %v298 = vpack.c.b16 %v297, %v296
        %v301 = vsel %vm243, %v293, 0
        %303 = vmatpush.bf16.msra.mxu0 0
        %304 = vmatpush.bf16.msra.mxu0 0
        %305 = vmatpush.bf16.msra.mxu0 0
        %306 = vmatpush.bf16.msra.mxu0 0
        %307 = vmatpush.bf16.msra.mxu0 0
        %308 = vmatpush.bf16.msra.mxu0 0
        %309 = vmatpush.bf16.msra.mxu0 0
        %310 = vmatpush.bf16.msra.mxu0 %v298
        %311 = vmatmul.bf16.gmra.mxu0 %v301
        %v312 = vpop.f32.mrf.mxu0
        %v313 = vadd.f32 0.0, %v312
        %v314 = vpop.f32.mrf.mxu0
        %v315 = vadd.f32 0.0, %v314
        %316 = vdwg.mxu0
        %v317 = vadd.f32 %v279, %v313
        %v318 = vadd.f32 %v281, %v315
        %v319 = vld [vmem:[%s2] sm:$0x1]
        %v321 = vperm.slane %v319, 0
        %v323 = vadd.f32 %v317, %v321
        %v324 = vadd.f32 %v318, %v321
        %325 = vst.msk [vmem:[%s194] sm:$0xff] %vm243, %v323
        %326 = vst.msk [vmem:[%s194 + $0x8] sm:$0xff] %vm243, %v324
        %v327 = vsel %vm243, %v323, 0.0
        %v328 = vsel %vm243, %v324, 0.0
        %v329 = vadd.f32 %v327, %v328
        %v330 = vrot.slane %v329, 4
        %v331 = vadd.f32 %v329, %v330
        %v332 = vrot.slane %v331, 2
        %v333 = vadd.f32 %v331, %v332
        %v334 = vrot.slane %v333, 1
        %v335 = vadd.f32 %v333, %v334
        %v336 = vmul.f32 %v323, %v323
        %v337 = vmul.f32 %v324, %v324
        %v338 = vsel %vm243, %v336, 0.0
        %v339 = vsel %vm243, %v337, 0.0
        %v340 = vadd.f32 %v338, %v339
        %v341 = vrot.slane %v340, 4
        %v342 = vadd.f32 %v340, %v341
        %v343 = vrot.slane %v342, 2
        %v344 = vadd.f32 %v342, %v343
        %v345 = vrot.slane %v344, 1
        %v346 = vadd.f32 %v344, %v345
        %vm347 = vcmask 1040384
        %v348 = vsel %vm347, %v335, %v346
        %vm349 = vcmask 123904
        %350 = vst.msk [vmem:[%s201] sm:$0x3] %vm349, %v348
        %s351 = sand.u32 %s98, 1
        %s352 = scalar_lea.sflag [#allocation3], %s351
        %s353 = sand.u32 %s98, 1
        %s354 = smul.addr %s353, 16
        %s355 = scalar_lea.vmem [#allocation2], %s354
        %s356 = sand.u32 %s124, 1
        %s357 = scalar_lea.sflag [#allocation5], %s356
        %s358 = sand.u32 %s124, 1
        %s359 = smul.addr %s358, 2
        %s360 = scalar_lea.vmem [#allocation4], %s359
        // Predicated region
        $region33: #{tpu_custom_call.1} parent=31 // pred_check
          %p361 = pneg %p108
        $region34: #{tpu_custom_call.1} parent=31 // pred_check_branch
          %363 = sbr.rel (%p361) target = $region36
        $region35: #{tpu_custom_call.1} parent=31 // pred_region
          %365 = vsyncadd %s352, 0
          %s366 = smul.addr %s22, 2
          %s367 = smul.addr %s366, 8
          %s368 = scalar_lea.hbm %s3, %s367
          %s369 = sshll.u32 %s355, 4
          %s370 = int_to_ptr.vmem [resolvable:$true] %s369
          %s371 = sshll.u32 %s368, 4
          %s372 = int_to_ptr.hbm [resolvable:$true] %s371
          %377 = dma.vmem_to_hbm [thread:$0]  %s370, 256, %s372, %s352, 128, 128, 8
        $region36: #{tpu_custom_call.1} parent=31 // pred_fallthru
          _
        // Predicated region
        $region37: #{tpu_custom_call.1} parent=31 // pred_check
          %p378 = pneg %p134
        $region38: #{tpu_custom_call.1} parent=31 // pred_check_branch
          %380 = sbr.rel (%p378) target = $region40
        $region39: #{tpu_custom_call.1} parent=31 // pred_region
          %382 = vsyncadd %s357, 0
          %s383 = smul.addr %s22, 2
          %s384 = scalar_lea.hbm %s4, %s383
          %s386 = sshll.u32 %s360, 4
          %s387 = int_to_ptr.vmem [resolvable:$true] %s386
          %s388 = sshll.u32 %s384, 4
          %s389 = int_to_ptr.hbm [resolvable:$true] %s388
          %391 = dma.vmem_to_hbm [thread:$0]  %s387, 32, %s389, %s357
        $region40: #{tpu_custom_call.1} parent=31 // pred_fallthru
          _
      $region32: #{tpu_custom_call.1} parent=5 // pred_fallthru
        _
      %p392 = scmp.le.s32.totalorder 2, %s17
      // Predicated region
      $region41: #{tpu_custom_call.1} parent=5 // pred_check
        %p393 = pneg %p392
      $region42: #{tpu_custom_call.1} parent=5 // pred_check_branch
        %395 = sbr.rel (%p393) target = $region44
      $region43: #{tpu_custom_call.1} parent=5 // pred_region
        %s396 = ssub.s32 %s17, 2
        // Predicated region
        $region45: #{tpu_custom_call.1} parent=43 // pred_check
          %p397 = pneg %p114
        $region46: #{tpu_custom_call.1} parent=43 // pred_check_branch
          %399 = sbr.rel (%p397) target = $region48
        $region47: #{tpu_custom_call.1} parent=43 // pred_region
          %s400 = sand.u32 %s99, 1
          %s401 = scalar_lea.sflag [#allocation3], %s400
          %s402 = sand.u32 %s99, 1
          %s403 = smul.addr %s402, 16
          %s404 = scalar_lea.vmem [#allocation2], %s403
          %406 = dma.done %s401, 256
        $region48: #{tpu_custom_call.1} parent=43 // pred_fallthru
          _
        // Predicated region
        $region49: #{tpu_custom_call.1} parent=43 // pred_check
          %p407 = pneg %p140
        $region50: #{tpu_custom_call.1} parent=43 // pred_check_branch
          %409 = sbr.rel (%p407) target = $region52
        $region51: #{tpu_custom_call.1} parent=43 // pred_region
          %s410 = sand.u32 %s125, 1
          %s411 = scalar_lea.sflag [#allocation5], %s410
          %s412 = sand.u32 %s125, 1
          %s413 = smul.addr %s412, 2
          %s414 = scalar_lea.vmem [#allocation4], %s413
          %416 = dma.done %s411, 32
        $region52: #{tpu_custom_call.1} parent=43 // pred_fallthru
          _
      $region44: #{tpu_custom_call.1} parent=5 // pred_fallthru
        _
    $region6: #{tpu_custom_call.1} parent=1 // loop_footer
      %s21 = sadd.s32 1, %s17
    $region7: #{tpu_custom_call.1} parent=1 // loop_footer_branch
      %16 = sbr.rel target = $region3
    $region8: #{tpu_custom_call.1} parent=1 // loop_exit
      _
    %417 = vsyncpa [#allocation3], 1
    %s418 = scalar_lea.sflag [#allocation3], 1
    %419 = vsyncpa %s418, 1
    %420 = vsyncpa [#allocation5], 1
    %s421 = scalar_lea.sflag [#allocation5], 1
    %422 = vsyncpa %s421, 1

</llo_original>
